<compile_context>
chip_gen: v7x
topology: tpu7x:2x2x1
jax: 0.10.0
libtpu: 0.0.40
codegen_flags: <defaults>
</compile_context>

<pallas_src>
import functools

import jax
import jax.numpy as jnp
from jax import lax
from jax.experimental import pallas as pl
from jax.experimental.pallas import tpu as pltpu


def _pow_gamma(u, gamma):
    """u ** gamma for u >= 0, avoiding the exp/log pow lowering (and its u==0 hazard)."""
    if gamma == 2.5:                      # module default: 2 VPU muls + 1 EUP sqrt
        return u * u * jnp.sqrt(u)
    if gamma == int(gamma) and 0 <= int(gamma) <= 8:
        r = jnp.ones_like(u)
        for _ in range(int(gamma)):
            r = r * u
        return r
    return jnp.where(u > 0.0,
                     jnp.exp(gamma * jnp.log(jnp.maximum(u, 1e-30))),
                     0.0)


def _focal_loss_kernel(x_ref, t_ref, out_ref, acc_ref, *,
                       gamma, ignore_index, hw, tile_pixels):
    i = pl.program_id(1)                       # pixel-tile index (reduction axis)

    @pl.when(i == 0)
    def _():
        acc_ref[...] = jnp.zeros_like(acc_ref)

    x = x_ref[0].astype(jnp.float32)           # (C, tp)  logits, pixels on lanes
    tgt = t_ref[0]                             # (1, tp)  int32 targets

    # log-sum-exp over the class (sublane) axis
    m = jnp.max(x, axis=0, keepdims=True)                       # (1, tp)
    lse = m + jnp.log(jnp.sum(jnp.exp(x - m), axis=0, keepdims=True))

    # target-class logit via a one-hot compare over the class axis (no gather needed)
    cls = lax.broadcasted_iota(jnp.int32, x.shape, 0)            # (C, tp)
    x_t = jnp.sum(jnp.where(cls == tgt, x, 0.0), axis=0, keepdims=True)

    # valid = not ignored AND inside the real pixel range (masks any ragged tail block)
    lane = lax.broadcasted_iota(jnp.int32, tgt.shape, 1)         # (1, tp)
    in_range = (i * tile_pixels + lane) < hw
    valid = (tgt != ignore_index) & in_range

    logpt = jnp.where(valid, lse - x_t, 0.0)   # per-pixel CE, 0 where ignored / OOB
    pt = jnp.exp(-logpt)
    u = jnp.maximum(1.0 - pt, 0.0)
    acc_ref[...] += _pow_gamma(u, gamma) * logpt

    @pl.when(i == pl.num_programs(1) - 1)
    def _():
        # one cross-lane reduce per image; broadcast scalar into the (1,1,128) out block
        out_ref[...] = jnp.zeros_like(out_ref) + jnp.sum(acc_ref[...])


def _round_up(a, b):
    return ((a + b - 1) // b) * b


def focal_loss(output, target, *, gamma=2.5, ignore_index=255, size_average=True,
               tile_pixels=None):
    """output: [N, C, H, W] float logits; target: [N, H, W] int labels."""
    # TODO(synk): alpha (per-class CE weights) not implemented; module default alpha=None.
    N, C, H, W = output.shape
    HW = H * W
    n_total = N * HW

    x = output.reshape(N, C, HW)                       # free reshape, native dtype
    t = target.reshape(N, 1, HW).astype(jnp.int32)

    LANE = 128
    if tile_pixels is None:
        # ~2 MiB of (f32) logits per block: near-roofline DMA; 2x double-buffered blocks
        # plus the target tile and scratch still fit default scoped VMEM on v5e/v6e/v7x.
        tile_pixels = max(LANE, ((2 * 1024 * 1024) // (4 * C)) // LANE * LANE)

    if HW % LANE == 0:
        tile_pixels = max(LANE, min((tile_pixels // LANE) * LANE, HW))
    elif tile_pixels >= HW:
        tile_pixels = HW                               # one full-width block per image
    else:
        # rare ragged case: HW is not a lane multiple and needs several tiles; pad the
        # pixel axis up to a lane multiple (padded pixels carry ignore_index and are also
        # excluded by the in-kernel range mask).
        tile_pixels = max(LANE, (tile_pixels // LANE) * LANE)
        hw_pad = _round_up(HW, LANE)
        x = jnp.pad(x, ((0, 0), (0, 0), (0, hw_pad - HW)))
        t = jnp.pad(t, ((0, 0), (0, 0), (0, hw_pad - HW)), constant_values=ignore_index)

    n_tiles = pl.cdiv(x.shape[2], tile_pixels)

    kernel = functools.partial(
        _focal_loss_kernel,
        gamma=float(gamma),
        ignore_index=int(ignore_index),
        hw=int(HW),
        tile_pixels=int(tile_pixels),
    )

    per_image = pl.pallas_call(
        kernel,
        out_shape=jax.ShapeDtypeStruct((N, 1, LANE), jnp.float32),
        grid_spec=pltpu.PrefetchScalarGridSpec(
            num_scalar_prefetch=0,
            grid=(N, n_tiles),
            in_specs=[
                pl.BlockSpec((1, C, tile_pixels), lambda n, i: (n, 0, i)),
                pl.BlockSpec((1, 1, tile_pixels), lambda n, i: (n, 0, i)),
            ],
            out_specs=pl.BlockSpec((1, 1, LANE), lambda n, i: (n, 0, 0)),
            scratch_shapes=[pltpu.VMEM((1, tile_pixels), jnp.float32)],
        ),
        compiler_params=pltpu.CompilerParams(
            dimension_semantics=("parallel", "arbitrary")),
    )(x, t)

    total = jnp.sum(per_image[:, 0, 0])                # all 128 lanes hold the same value
    return total / n_total if size_average else total


def _focal_loss_ref(output, target, *, gamma=2.5, ignore_index=255, size_average=True):
    """Pure-JAX reference mirroring the PyTorch module."""
    N, C, H, W = output.shape
    x = jnp.transpose(output, (0, 2, 3, 1)).reshape(-1, C).astype(jnp.float32)
    t = target.reshape(-1).astype(jnp.int32)
    lse = jax.nn.logsumexp(x, axis=-1)
    x_t = jnp.take_along_axis(x, jnp.clip(t, 0, C - 1)[:, None], axis=-1)[:, 0]
    valid = t != ignore_index
    logpt = jnp.where(valid, lse - x_t, 0.0)
    pt = jnp.exp(-logpt)
    loss = jnp.power(jnp.maximum(1.0 - pt, 0.0), gamma) * logpt
    return loss.mean() if size_average else loss.sum()


if __name__ == "__main__":
    # case 1: nominal small shape, mean reduction
    k1, k2, k3 = jax.random.split(jax.random.PRNGKey(0), 3)
    N, C, H, W = 2, 4, 16, 16
    logits = jax.random.normal(k1, (N, C, H, W), dtype=jnp.float32)
    target = jax.random.randint(k2, (N, H, W), 0, C, dtype=jnp.int32)
    target = jnp.where(jax.random.uniform(k3, (N, H, W)) < 0.1, 255, target)
    out = jax.block_until_ready(focal_loss(logits, target))
    ref = jax.block_until_ready(_focal_loss_ref(logits, target))
    assert jnp.allclose(out, ref, rtol=1e-5, atol=1e-6), (out, ref)

    # case 2: ragged pixel tail (H*W not a multiple of the tile) + sum reduction
    k4, k5, k6 = jax.random.split(jax.random.PRNGKey(1), 3)
    N, C, H, W = 2, 5, 16, 24          # HW = 384; tile 256 -> masked tail block
    logits = jax.random.normal(k4, (N, C, H, W), dtype=jnp.float32)
    target = jax.random.randint(k5, (N, H, W), 0, C, dtype=jnp.int32)
    target = jnp.where(jax.random.uniform(k6, (N, H, W)) < 0.1, 255, target)
    out = jax.block_until_ready(
        focal_loss(logits, target, size_average=False, tile_pixels=256))
    ref = jax.block_until_ready(_focal_loss_ref(logits, target, size_average=False))
    assert jnp.allclose(out, ref, rtol=1e-5, atol=1e-5), (out, ref)

    # case 3: H*W not a lane multiple (single full-width block per image), bf16 logits
    k7, k8 = jax.random.split(jax.random.PRNGKey(2), 2)
    N, C, H, W = 2, 3, 10, 10          # HW = 100
    logits = jax.random.normal(k7, (N, C, H, W), dtype=jnp.bfloat16)
    target = jax.random.randint(k8, (N, H, W), 0, C, dtype=jnp.int32)
    out = jax.block_until_ready(focal_loss(logits, target))
    ref = jax.block_until_ready(_focal_loss_ref(logits, target))
    assert jnp.allclose(out, ref, rtol=1e-5, atol=1e-6), (out, ref)

    print("KERNEL_OK")
</pallas_src>

<mosaic_0001>
module attributes {stable_mosaic.version = 11 : i64} {
  func.func @_focal_loss_kernel(%arg0: i32, %arg1: i32, %arg2: memref<1x4x256xf32, #tpu.memory_space<vmem>>, %arg3: memref<1x1x256xi32, #tpu.memory_space<vmem>>, %arg4: memref<1x1x128xf32, #tpu.memory_space<vmem>>, %arg5: memref<1x256xf32, #tpu.memory_space<vmem>>) attributes {dimension_semantics = [#tpu.dimension_semantics<parallel>, #tpu.dimension_semantics<arbitrary>], iteration_bounds = array<i64: 2, 1>, scalar_prefetch = 0 : i64, scratch_operands = 1 : i64, tpu.core_type = #tpu.core_type<tc>, window_params = [{transform_indices = @transform_0, window_bounds = array<i64: 1, 4, 256>}, {transform_indices = @transform_1, window_bounds = array<i64: 1, 1, 256>}, {transform_indices = @transform_2, window_bounds = array<i64: 1, 1, 128>}]} {
    %c0_i32 = arith.constant 0 : i32
    %0 = arith.cmpi eq, %arg1, %c0_i32 : i32
    %1 = arith.extui %0 : i1 to i32
    %c0_i32_0 = arith.constant 0 : i32
    %2 = arith.cmpi ne, %1, %c0_i32_0 : i32
    scf.if %2 {
      %cst_20 = arith.constant 0.000000e+00 : f32
      %52 = vector.broadcast %cst_20 : f32 to vector<1x256xf32>
      %c0_21 = arith.constant 0 : index
      %c0_22 = arith.constant 0 : index
      %53 = vector.load %arg5[%c0_21, %c0_22] : memref<1x256xf32, #tpu.memory_space<vmem>>, vector<1x256xf32>
      tpu.vector_store %arg5[%c0_21, %c0_22], %52 {strides = array<i32>} : memref<1x256xf32, #tpu.memory_space<vmem>>, vector<1x256xf32>,
    } else {
    }
    %c0 = arith.constant 0 : index
    %c0_1 = arith.constant 0 : index
    %c0_2 = arith.constant 0 : index
    %3 = vector.load %arg2[%c0, %c0_1, %c0_2] : memref<1x4x256xf32, #tpu.memory_space<vmem>>, vector<1x4x256xf32>
    %4 = vector.shape_cast %3 : vector<1x4x256xf32> to vector<4x256xf32>
    %c0_3 = arith.constant 0 : index
    %c0_4 = arith.constant 0 : index
    %c0_5 = arith.constant 0 : index
    %5 = vector.load %arg3[%c0_3, %c0_4, %c0_5] : memref<1x1x256xi32, #tpu.memory_space<vmem>>, vector<1x1x256xi32>
    %6 = vector.shape_cast %5 : vector<1x1x256xi32> to vector<1x256xi32>
    %cst = arith.constant dense<0xFF800000> : vector<256xf32>
    %7 = vector.multi_reduction <maximumf>, %4, %cst [0] : vector<4x256xf32> to vector<256xf32>
    %8 = vector.shape_cast %7 : vector<256xf32> to vector<1x256xf32>
    %9 = vector.broadcast %8 : vector<1x256xf32> to vector<4x256xf32>
    %10 = arith.subf %4, %9 : vector<4x256xf32>
    %11 = math.exp %10 : vector<4x256xf32>
    %cst_6 = arith.constant dense<0.000000e+00> : vector<256xf32>
    %12 = vector.multi_reduction <add>, %11, %cst_6 [0] : vector<4x256xf32> to vector<256xf32>
    %13 = vector.shape_cast %12 : vector<256xf32> to vector<1x256xf32>
    %14 = math.log %13 : vector<1x256xf32>
    %15 = arith.addf %8, %14 : vector<1x256xf32>
    %16 = tpu.iota {dimensions = array<i32: 0>} : vector<4x256xi32>
    %17 = vector.broadcast %6 : vector<1x256xi32> to vector<4x256xi32>
    %18 = arith.cmpi eq, %16, %17 : vector<4x256xi32>
    %cst_7 = arith.constant 0.000000e+00 : f32
    %19 = vector.broadcast %cst_7 : f32 to vector<4x256xf32>
    %20 = arith.select %18, %4, %19 : vector<4x256xi1>, vector<4x256xf32>
    %cst_8 = arith.constant dense<0.000000e+00> : vector<256xf32>
    %21 = vector.multi_reduction <add>, %20, %cst_8 [0] : vector<4x256xf32> to vector<256xf32>
    %22 = vector.shape_cast %21 : vector<256xf32> to vector<1x256xf32>
    %23 = tpu.iota {dimensions = array<i32: 1>} : vector<1x256xi32>
    %c256_i32 = arith.constant 256 : i32
    %24 = arith.muli %arg1, %c256_i32 : i32
    %25 = vector.broadcast %24 : i32 to vector<1x256xi32>
    %26 = arith.addi %25, %23 : vector<1x256xi32>
    %c256_i32_9 = arith.constant 256 : i32
    %27 = vector.broadcast %c256_i32_9 : i32 to vector<1x256xi32>
    %28 = arith.cmpi slt, %26, %27 : vector<1x256xi32>
    %c255_i32 = arith.constant 255 : i32
    %29 = vector.broadcast %c255_i32 : i32 to vector<1x256xi32>
    %30 = arith.cmpi ne, %6, %29 : vector<1x256xi32>
    %31 = arith.andi %30, %28 : vector<1x256xi1>
    %32 = arith.subf %15, %22 : vector<1x256xf32>
    %cst_10 = arith.constant 0.000000e+00 : f32
    %33 = vector.broadcast %cst_10 : f32 to vector<1x256xf32>
    %34 = arith.select %31, %32, %33 : vector<1x256xi1>, vector<1x256xf32>
    %cst_11 = arith.constant 0.000000e+00 : f32
    %35 = vector.broadcast %cst_11 : f32 to vector<1x256xf32>
    %36 = arith.subf %35, %34 : vector<1x256xf32>
    %37 = math.exp %36 : vector<1x256xf32>
    %cst_12 = arith.constant 1.000000e+00 : f32
    %38 = vector.broadcast %cst_12 : f32 to vector<1x256xf32>
    %39 = arith.subf %38, %37 : vector<1x256xf32>
    %cst_13 = arith.constant 0.000000e+00 : f32
    %40 = vector.broadcast %cst_13 : f32 to vector<1x256xf32>
    %41 = arith.maximumf %39, %40 : vector<1x256xf32>
    %c0_14 = arith.constant 0 : index
    %c0_15 = arith.constant 0 : index
    %42 = vector.load %arg5[%c0_14, %c0_15] : memref<1x256xf32, #tpu.memory_space<vmem>>, vector<1x256xf32>
    %43 = arith.mulf %41, %41 : vector<1x256xf32>
    %44 = math.sqrt %41 : vector<1x256xf32>
    %45 = arith.mulf %43, %44 : vector<1x256xf32>
    %46 = arith.mulf %45, %34 : vector<1x256xf32>
    %47 = arith.addf %42, %46 : vector<1x256xf32>
    %c0_16 = arith.constant 0 : index
    %c0_17 = arith.constant 0 : index
    %48 = vector.load %arg5[%c0_16, %c0_17] : memref<1x256xf32, #tpu.memory_space<vmem>>, vector<1x256xf32>
    tpu.vector_store %arg5[%c0_16, %c0_17], %47 {strides = array<i32>} : memref<1x256xf32, #tpu.memory_space<vmem>>, vector<1x256xf32>,
    %c0_i32_18 = arith.constant 0 : i32
    %49 = arith.cmpi eq, %arg1, %c0_i32_18 : i32
    %50 = arith.extui %49 : i1 to i32
    %c0_i32_19 = arith.constant 0 : i32
    %51 = arith.cmpi ne, %50, %c0_i32_19 : i32
    scf.if %51 {
      %cst_20 = arith.constant 0.000000e+00 : f32
      %52 = vector.broadcast %cst_20 : f32 to vector<1x1x128xf32>
      %c0_21 = arith.constant 0 : index
      %c0_22 = arith.constant 0 : index
      %53 = vector.load %arg5[%c0_21, %c0_22] : memref<1x256xf32, #tpu.memory_space<vmem>>, vector<1x256xf32>
      %54 = vector.shape_cast %53 : vector<1x256xf32> to vector<1x1x256xf32>
      %cst_23 = arith.constant dense<0.000000e+00> : vector<1xf32>
      %55 = vector.multi_reduction <add>, %54, %cst_23 [1, 2] : vector<1x1x256xf32> to vector<1xf32>
      %56 = vector.shape_cast %55 : vector<1xf32> to vector<1x1x1xf32>
      %57 = vector.extract %56[0, 0, 0] : f32 from vector<1x1x1xf32>
      %58 = vector.broadcast %57 : f32 to vector<1x1x128xf32>
      %59 = arith.addf %52, %58 : vector<1x1x128xf32>
      %c0_24 = arith.constant 0 : index
      %c0_25 = arith.constant 0 : index
      %c0_26 = arith.constant 0 : index
      %60 = vector.load %arg4[%c0_24, %c0_25, %c0_26] : memref<1x1x128xf32, #tpu.memory_space<vmem>>, vector<1x1x128xf32>
      tpu.vector_store %arg4[%c0_24, %c0_25, %c0_26], %59 {strides = array<i32>} : memref<1x1x128xf32, #tpu.memory_space<vmem>>, vector<1x1x128xf32>,
    } else {
    }
    return
  }
  func.func @transform_0(%arg0: i32, %arg1: i32) -> (i32, i32, i32) {
    %c0_i32 = arith.constant 0 : i32
    %c0_i32_0 = arith.constant 0 : i32
    return %arg0, %c0_i32, %arg1 : i32, i32, i32
  }
  func.func @transform_1(%arg0: i32, %arg1: i32) -> (i32, i32, i32) {
    %c0_i32 = arith.constant 0 : i32
    %c0_i32_0 = arith.constant 0 : i32
    return %arg0, %c0_i32, %arg1 : i32, i32, i32
  }
  func.func @transform_2(%arg0: i32, %arg1: i32) -> (i32, i32, i32) {
    %c0_i32 = arith.constant 0 : i32
    %c0_i32_0 = arith.constant 0 : i32
    %c0_i32_1 = arith.constant 0 : i32
    return %arg0, %c0_i32, %c0_i32_0 : i32, i32, i32
  }
}

</mosaic_0001>

<llo_original>
// kernel: tpu_custom_call.1
$region0: #{tpu_custom_call.1}
  #allocation0 [shape = 'u32[]', space=smem, size = 0x4, offset = 0x4, fixed_abs, tag = 'smem constant byte address 0x4 - core index']
  #allocation1 [shape = 'u32[144,128]{1,0:T(1,128)}', space=vmem, size = 0x12000, scoped, tag = 'internal scratch']
  #allocation2 [shape = 'f32[1,256]{1,0:T(1,128)}', space=vmem, size = 0x400, scoped, tag = 'scratch operand']
  %s0 = inlined_call_operand.hbm [shape: f32[2,4,256], index: 0, kind: input, shape index: {}]
  %s1 = inlined_call_operand.hbm [shape: s32[2,1,256], index: 1, kind: input, shape index: {}]
  %s2 = inlined_call_operand.hbm [shape: f32[2,1,128], index: 2, kind: output, shape index: {}]
  %s3 = sld [smem:[#allocation0]]
  $region57: #{tpu_custom_call.1} parent=0
    _
  %s5 = ssub.s32 1, %s3
  %s6 = scalar_select 0, %s5, %s3
  $region1: #{tpu_custom_call.1} parent=0
    #allocation3 [shape = 'u8[8192]{0}', space=vmem, size = 0x2000, scoped, tag = 'input window, operand 0']
    #allocation4 [shape = 's32[2]{0}', space=sflag, size = 0x8, scoped, tag = 'scoped memory for tpu_custom_call.1']
    #allocation5 [shape = 's32[2]{0}', space=sflag, size = 0x8, scoped, tag = 'scoped memory for tpu_custom_call.1']
    #allocation6 [shape = 'u8[2048]{0}', space=vmem, size = 0x800, scoped, tag = 'input window, operand 1']
    #allocation7 [shape = 's32[2]{0}', space=sflag, size = 0x8, scoped, tag = 'scoped memory for tpu_custom_call.1']
    #allocation8 [shape = 'u8[1024]{0}', space=vmem, size = 0x400, scoped, tag = 'output window, operand 0']
    %7 = vsyncpa [#allocation4], 0
    %s8 = scalar_lea.sflag [#allocation4], 1
    %9 = vsyncpa %s8, 0
    %10 = vsyncpa [#allocation7], 0
    %s11 = scalar_lea.sflag [#allocation7], 1
    %12 = vsyncpa %s11, 0
    %13 = vsyncpa [#allocation5], 0
    %s14 = scalar_lea.sflag [#allocation5], 1
    %15 = vsyncpa %s14, 0
    loop: start=0, step=1, limit=4
    $region2: #{tpu_custom_call.1} parent=1 // loop_pre_header
      _
    $region3: #{tpu_custom_call.1} parent=1 // loop_header
      %s17 = sphi 0, %s21
      %p18 = scmp.ge.s32.totalorder %s17, 4
      %s24 = sphi 0, %s36
      %s25 = sphi 0, %s32
      %s26 = sphi 0, %s24
      %s27 = sphi 0, %s25
      %s28 = sphi 0, %s26
      %s29 = sphi 0, %s27
      %s41 = sphi 0, %s43
      %s44 = sphi 0, %s41
      %s45 = sphi 0, %s44
      %s61 = sphi 0, %s45
      %s69 = sphi 0, %s71
      %s72 = sphi 0, %s69
      %s73 = sphi 0, %s72
      %s89 = sphi 0, %s73
      %s95 = sphi 0, %s97
      %s98 = sphi 0, %s95
      %s99 = sphi 0, %s98
      %s115 = sphi 0, %s99
    $region4: #{tpu_custom_call.1} parent=1 // loop_header_branch
      %20 = sbr.rel (%p18) target = $region8
    $region5: #{tpu_custom_call.1} parent=1 // loop_body
      %s22 = ssub.s32 %s17, 1
      %s23 = ssub.s32 %s17, 2
      %s30 = sadd.s32 1, %s25
      %p31 = scmp.ge.s32.totalorder %s30, 1
      %s32 = scalar_select %p31, 0, %s30
      %s33 = sadd.s32 1, %s24
      %s34 = scalar_select %p31, %s33, %s24
      %p35 = scmp.ge.s32.totalorder %s34, 2
      %s36 = scalar_select %p35, 0, %s34
      %s37 = ssub.s32 %s24, %s36
      %s38 = ssub.s32 %s25, %s32
      %s39 = sor.u32 %s37, %s38
      %p40 = scmp.eq.s32.totalorder %s39, 0
      %s42 = sadd.s32 %s41, 1
      %s43 = scalar_select %p40, %s41, %s42
      %p46 = pneg %p40
      %p47 = scmp.eq.s32.totalorder %s17, 1
      %p48 = por %p46, %p47
      %p49 = scmp.ne.s32.totalorder %s41, %s44
      %p50 = scmp.eq.s32.totalorder %s17, 0
      %p51 = por %p49, %p50
      %p52 = scmp.ne.s32.totalorder %s41, %s44
      %p53 = scmp.eq.s32.totalorder %s22, 1
      %p54 = por %p52, %p53
      %p55 = scmp.ne.s32.totalorder %s44, %s45
      %p56 = scmp.eq.s32.totalorder %s22, 0
      %p57 = por %p55, %p56
      %p58 = scmp.ne.s32.totalorder %s44, %s45
      %p59 = scmp.eq.s32.totalorder %s23, 1
      %p60 = por %p58, %p59
      %p62 = scmp.ne.s32.totalorder %s45, %s61
      %p63 = scmp.eq.s32.totalorder %s23, 0
      %p64 = por %p62, %p63
      %s65 = ssub.s32 %s24, %s36
      %s66 = ssub.s32 %s25, %s32
      %s67 = sor.u32 %s65, %s66
      %p68 = scmp.eq.s32.totalorder %s67, 0
      %s70 = sadd.s32 %s69, 1
      %s71 = scalar_select %p68, %s69, %s70
      %p74 = pneg %p68
      %p75 = scmp.eq.s32.totalorder %s17, 1
      %p76 = por %p74, %p75
      %p77 = scmp.ne.s32.totalorder %s69, %s72
      %p78 = scmp.eq.s32.totalorder %s17, 0
      %p79 = por %p77, %p78
      %p80 = scmp.ne.s32.totalorder %s69, %s72
      %p81 = scmp.eq.s32.totalorder %s22, 1
      %p82 = por %p80, %p81
      %p83 = scmp.ne.s32.totalorder %s72, %s73
      %p84 = scmp.eq.s32.totalorder %s22, 0
      %p85 = por %p83, %p84
      %p86 = scmp.ne.s32.totalorder %s72, %s73
      %p87 = scmp.eq.s32.totalorder %s23, 1
      %p88 = por %p86, %p87
      %p90 = scmp.ne.s32.totalorder %s73, %s89
      %p91 = scmp.eq.s32.totalorder %s23, 0
      %p92 = por %p90, %p91
      %s93 = ssub.s32 %s24, %s36
      %p94 = scmp.eq.s32.totalorder %s93, 0
      %s96 = sadd.s32 %s95, 1
      %s97 = scalar_select %p94, %s95, %s96
      %p100 = pneg %p94
      %p101 = scmp.eq.s32.totalorder %s17, 1
      %p102 = por %p100, %p101
      %p103 = scmp.ne.s32.totalorder %s95, %s98
      %p104 = scmp.eq.s32.totalorder %s17, 0
      %p105 = por %p103, %p104
      %p106 = scmp.ne.s32.totalorder %s95, %s98
      %p107 = scmp.eq.s32.totalorder %s22, 1
      %p108 = por %p106, %p107
      %p109 = scmp.ne.s32.totalorder %s98, %s99
      %p110 = scmp.eq.s32.totalorder %s22, 0
      %p111 = por %p109, %p110
      %p112 = scmp.ne.s32.totalorder %s98, %s99
      %p113 = scmp.eq.s32.totalorder %s23, 1
      %p114 = por %p112, %p113
      %p116 = scmp.ne.s32.totalorder %s99, %s115
      %p117 = scmp.eq.s32.totalorder %s23, 0
      %p118 = por %p116, %p117
      %p119 = scmp.le.s32.totalorder 1, %s17
      %p120 = scmp.lt.s32.totalorder %s17, 3
      %p121 = pnand %p119, %p120
      %p122 = pneg %p121
      // Predicated region
      $region9: #{tpu_custom_call.1} parent=5 // pred_check
        _
      $region10: #{tpu_custom_call.1} parent=5 // pred_check_branch
        %124 = sbr.rel (%p121) target = $region12
      $region11: #{tpu_custom_call.1} parent=5 // pred_region
        %s125 = ssub.s32 %s17, 1
      $region12: #{tpu_custom_call.1} parent=5 // pred_fallthru
        _
      %p126 = scmp.lt.s32.totalorder %s17, 2
      // Predicated region
      $region13: #{tpu_custom_call.1} parent=5 // pred_check
        %p127 = pneg %p126
      $region14: #{tpu_custom_call.1} parent=5 // pred_check_branch
        %129 = sbr.rel (%p127) target = $region16
      $region15: #{tpu_custom_call.1} parent=5 // pred_region
        // Predicated region
        $region17: #{tpu_custom_call.1} parent=15 // pred_check
          %p130 = pneg %p51
        $region18: #{tpu_custom_call.1} parent=15 // pred_check_branch
          %132 = sbr.rel (%p130) target = $region20
        $region19: #{tpu_custom_call.1} parent=15 // pred_region
          %s133 = sand.u32 %s41, 1
          %s134 = scalar_lea.sflag [#allocation4], %s133
          %s135 = sand.u32 %s41, 1
          %s136 = smul.addr %s135, 8
          %s137 = scalar_lea.vmem [#allocation3], %s136
          %s138 = smul.u32 2, %s25
          %s140 = ssub.s32 128, 128
          %141 = vsyncadd %s134, %s140
          %s142 = smul.addr %s24, 2
          %s143 = sadd.s32 %s138, %s142
          %s144 = smul.addr %s143, 64
          %s145 = scalar_lea.hbm %s0, %s144
          %s147 = sshll.u32 %s137, 4
          %s148 = int_to_ptr.vmem [resolvable:$true] %s147
          %150 = dma.hbm_to_vmem [thread:$0]  %s145, 128, %s148, %s134
        $region20: #{tpu_custom_call.1} parent=15 // pred_fallthru
          _
        // Predicated region
        $region21: #{tpu_custom_call.1} parent=15 // pred_check
          %p151 = pneg %p79
        $region22: #{tpu_custom_call.1} parent=15 // pred_check_branch
          %153 = sbr.rel (%p151) target = $region24
        $region23: #{tpu_custom_call.1} parent=15 // pred_region
          %s154 = sand.u32 %s69, 1
          %s155 = scalar_lea.sflag [#allocation7], %s154
          %s156 = sand.u32 %s69, 1
          %s157 = smul.addr %s156, 2
          %s158 = scalar_lea.vmem [#allocation6], %s157
          %s159 = smul.u32 2, %s25
          %s161 = ssub.s32 32, 32
          %162 = vsyncadd %s155, %s161
          %s163 = smul.addr %s24, 2
          %s164 = sadd.s32 %s159, %s163
          %s165 = smul.addr %s164, 16
          %s166 = scalar_lea.hbm %s1, %s165
          %s168 = sshll.u32 %s158, 4
          %s169 = int_to_ptr.vmem [resolvable:$true] %s168
          %171 = dma.hbm_to_vmem [thread:$0]  %s166, 32, %s169, %s155
        $region24: #{tpu_custom_call.1} parent=15 // pred_fallthru
          _
      $region16: #{tpu_custom_call.1} parent=5 // pred_fallthru
        _
      %p172 = scmp.le.s32.totalorder 1, %s17
      %p173 = scmp.lt.s32.totalorder %s17, 3
      %p174 = pnand %p172, %p173
      %p175 = pneg %p174
      // Predicated region
      $region25: #{tpu_custom_call.1} parent=5 // pred_check
        _
      $region26: #{tpu_custom_call.1} parent=5 // pred_check_branch
        %177 = sbr.rel (%p174) target = $region28
      $region27: #{tpu_custom_call.1} parent=5 // pred_region
        %s178 = ssub.s32 %s17, 1
        %s179 = sand.u32 %s44, 1
        %s180 = scalar_lea.sflag [#allocation4], %s179
        %s181 = sand.u32 %s44, 1
        %s182 = smul.addr %s181, 8
        %s183 = scalar_lea.vmem [#allocation3], %s182
        // Predicated region
        $region29: #{tpu_custom_call.1} parent=27 // pred_check
          %p184 = pneg %p57
        $region30: #{tpu_custom_call.1} parent=27 // pred_check_branch
          %186 = sbr.rel (%p184) target = $region32
        $region31: #{tpu_custom_call.1} parent=27 // pred_region
          %187 = dma.done %s180, 128
        $region32: #{tpu_custom_call.1} parent=27 // pred_fallthru
          _
        %s188 = sand.u32 %s72, 1
        %s189 = scalar_lea.sflag [#allocation7], %s188
        %s190 = sand.u32 %s72, 1
        %s191 = smul.addr %s190, 2
        %s192 = scalar_lea.vmem [#allocation6], %s191
        // Predicated region
        $region33: #{tpu_custom_call.1} parent=27 // pred_check
          %p193 = pneg %p85
        $region34: #{tpu_custom_call.1} parent=27 // pred_check_branch
          %195 = sbr.rel (%p193) target = $region36
        $region35: #{tpu_custom_call.1} parent=27 // pred_region
          %196 = dma.done %s189, 32
        $region36: #{tpu_custom_call.1} parent=27 // pred_fallthru
          _
        %s197 = sand.u32 %s44, 1
        %s198 = scalar_lea.sflag [#allocation4], %s197
        %s199 = sand.u32 %s44, 1
        %s200 = smul.addr %s199, 8
        %s201 = scalar_lea.vmem [#allocation3], %s200
        %p202 = pneg %p57
        %p203 = pneg %p54
        %s204 = sand.u32 %s72, 1
        %s205 = scalar_lea.sflag [#allocation7], %s204
        %s206 = sand.u32 %s72, 1
        %s207 = smul.addr %s206, 2
        %s208 = scalar_lea.vmem [#allocation6], %s207
        %p209 = pneg %p85
        %p210 = pneg %p82
        %p211 = pneg %p111
        %p212 = pneg %p108
        %s213 = sand.u32 %s98, 1
        %s214 = scalar_lea.sflag [#allocation5], %s213
        %s215 = sand.u32 %s98, 1
        %s216 = scalar_lea.vmem [#allocation8], %s215
        %s217 = smul.u32 2, %s27
        %s218 = smul.u32 2, %s27
        %p219 = scmp.eq.s32.totalorder %s27, 0
        // Predicated region
        $region37: #{tpu_custom_call.1} parent=27 // pred_check
          %p220 = pneg %p219
        $region38: #{tpu_custom_call.1} parent=27 // pred_check_branch
          %222 = sbr.rel (%p220) target = $region40
        $region39: #{tpu_custom_call.1} parent=27 // pred_region
          %v223 = vlaneseq
          %vm224 = vcmp.ge.s32.totalorder %v223, 0
          %vm225 = vcmp.lt.s32.totalorder %v223, 256
          %vm226 = vmand %vm224, %vm225
          %227 = vst.msk [vmem:[#allocation2] sm:$0x3] %vm226, 0.0
        $region40: #{tpu_custom_call.1} parent=27 // pred_fallthru
          _
        %v228 = vld [vmem:[%s183] sm:$0xff]
        %v229 = vld [vmem:[%s192] sm:$0x3]
        %v231 = vcombine.high %v228, %v228
        %vm233 = vcmask 1043456
        %v234 = vsel %vm233, %v228, -inf
        %v235 = vrot.slane %v234, 4
        %v236 = vmax.f32 %v234, %v235
        %v237 = vrot.slane %v236, 2
        %v238 = vmax.f32 %v236, %v237
        %v239 = vrot.slane %v238, 1
        %v240 = vmax.f32 %v238, %v239
        %v241 = vsel %vm233, %v231, -inf
        %v242 = vrot.slane %v241, 4
        %v243 = vmax.f32 %v241, %v242
        %v244 = vrot.slane %v243, 2
        %v245 = vmax.f32 %v243, %v244
        %v246 = vrot.slane %v245, 1
        %v247 = vmax.f32 %v245, %v246
        %v250 = vcombine.low %v240, %v247
        %v252 = vsub.f32 %v228, %v250
        %v253 = vmul.f32 %v252, 1.442695
        %v254 = vpow.pop %v253
        %v256 = vcombine.high %v254, %v254
        %v258 = vsel %vm233, %v254, 0.0
        %v259 = vrot.slane %v258, 4
        %v260 = vadd.f32 %v258, %v259
        %v261 = vrot.slane %v260, 2
        %v262 = vadd.f32 %v260, %v261
        %v263 = vrot.slane %v262, 1
        %v264 = vadd.f32 %v262, %v263
        %v265 = vsel %vm233, %v256, 0.0
        %v266 = vrot.slane %v265, 4
        %v267 = vadd.f32 %v265, %v266
        %v268 = vrot.slane %v267, 2
        %v269 = vadd.f32 %v267, %v268
        %v270 = vrot.slane %v269, 1
        %v271 = vadd.f32 %v269, %v270
        %v272 = vlog2.pop %v264
        %v273 = vmul.f32 %v272, 0.6931472
        %v274 = vlog2.pop %v271
        %v275 = vmul.f32 %v274, 0.6931472
        %v276 = vadd.f32 %v240, %v273
        %v277 = vadd.f32 %v247, %v275
        %v278 = vlaneseq
        %v279 = vshrl.u32 %v278, 7
        %v280 = vlaneseq
        %v281 = vshrl.u32 %v280, 7
        %v282 = vsub.s32 0, %v281
        %v283 = vrot.slane %v229, %v282
        %v284 = vlaneseq
        %v285 = vshrl.u32 %v284, 7
        %v286 = vsub.s32 1, %v285
        %v287 = vrot.slane %v229, %v286
        %vm288 = vcmp.eq.s32.totalorder %v279, %v283
        %vm289 = vcmp.eq.s32.totalorder %v279, %v287
        %v290 = vsel %vm288, %v228, 0.0
        %v291 = vsel %vm289, %v231, 0.0
        %v292 = vsel %vm233, %v290, 0.0
        %v293 = vrot.slane %v292, 4
        %v294 = vadd.f32 %v292, %v293
        %v295 = vrot.slane %v294, 2
        %v296 = vadd.f32 %v294, %v295
        %v297 = vrot.slane %v296, 1
        %v298 = vadd.f32 %v296, %v297
        %v299 = vsel %vm233, %v291, 0.0
        %v300 = vrot.slane %v299, 4
        %v301 = vadd.f32 %v299, %v300
        %v302 = vrot.slane %v301, 2
        %v303 = vadd.f32 %v301, %v302
        %v304 = vrot.slane %v303, 1
        %v305 = vadd.f32 %v303, %v304
        %v306 = vlaneseq
        %v307 = vand.u32 %v306, 127
        %v308 = vadd.s32 %v307, 128
        %s309 = smul.u32 %s27, 256
        %v310 = vstv %s309
        %v311 = vadd.s32 %v310, %v307
        %v312 = vadd.s32 %v310, %v308
        %vm313 = vcmp.lt.s32.totalorder %v311, 256
        %vm314 = vcmp.lt.s32.totalorder %v312, 256
        %vm315 = vcmp.ne.s32.totalorder %v229, 255
        %v316 = vsel %vm313, 1, 0
        %v317 = vsel %vm314, 1, 0
        %v318 = vcombine.low %v316, %v317
        %v320 = vunpack.c.l.s4 1966171168
        %v321 = vunpack.c.0.s8 %v320
        %v322 = vlaneseq
        %v323 = vshrl.u32 %v322, 7
        %v324 = vsub.s32 %v321, %v323
        %v325 = vrot.slane %v318, %v324
        %v327 = vunpack.c.l.s4 1966171168
        %v328 = vunpack.c.0.s8 %v327
        %v329 = vlaneseq
        %v330 = vshrl.u32 %v329, 7
        %v331 = vsub.s32 %v328, %v330
        %v332 = vrot.slane %v325, %v331
        %vm333 = vcmp.ne.s32.totalorder %v332, 0
        %vm334 = vmand %vm315, %vm333
        %v335 = vsub.f32 %v276, %v298
        %v336 = vsub.f32 %v277, %v305
        %v339 = vcombine.low %v335, %v336
        %v341 = vunpack.c.l.s4 1966171168
        %v342 = vunpack.c.0.s8 %v341
        %v343 = vlaneseq
        %v344 = vshrl.u32 %v343, 7
        %v345 = vsub.s32 %v342, %v344
        %v346 = vrot.slane %v339, %v345
        %v348 = vunpack.c.l.s4 1966171168
        %v349 = vunpack.c.0.s8 %v348
        %v350 = vlaneseq
        %v351 = vshrl.u32 %v350, 7
        %v352 = vsub.s32 %v349, %v351
        %v353 = vrot.slane %v346, %v352
        %v355 = vsel %vm334, %v353, 0.0
        %v356 = vsub.f32 0.0, %v355
        %v357 = vmul.f32 %v356, 1.442695
        %v358 = vpow.pop %v357
        %v359 = vsub.f32 1.0, %v358
        %v360 = vmax.f32 %v359, 0.0
        %v361 = vld [vmem:[#allocation2] sm:$0x3]
        %v362 = vmul.f32 %v360, %v360
        %v363 = vrsqrt.pop %v360
        %v364 = vmul.f32 %v360, %v363
        %vm365 = vcmp.eq.f32.partialorder %v360, inf
        %v366 = vsel %vm365, %v360, %v364
        %vm367 = vcmp.eq.f32.partialorder %v360, 0.0
        %v368 = vand.u32 %v360, 2147483648
        %v369 = vsel %vm367, %v368, %v366
        %v370 = vmul.f32 %v362, %v369
        %v371 = vmul.f32 %v370, %v355
        %v372 = vadd.f32 %v361, %v371
        %v373 = vlaneseq
        %vm374 = vcmp.ge.s32.totalorder %v373, 0
        %vm375 = vcmp.lt.s32.totalorder %v373, 256
        %vm376 = vmand %vm374, %vm375
        %377 = vst.msk [vmem:[#allocation2] sm:$0x3] %vm376, %v372
        // Predicated region
        $region41: #{tpu_custom_call.1} parent=27 // pred_check
          %p378 = pneg %p219
        $region42: #{tpu_custom_call.1} parent=27 // pred_check_branch
          %380 = sbr.rel (%p378) target = $region44
        $region43: #{tpu_custom_call.1} parent=27 // pred_region
          %v381 = vld [vmem:[#allocation2] sm:$0x3]
          %v383 = vlaneseq
          %v384 = vshrl.u32 %v383, 7
          %v385 = vsub.s32 0, %v384
          %v386 = vrot.slane %v381, %v385
          %v387 = vlaneseq
          %v388 = vshrl.u32 %v387, 7
          %v389 = vsub.s32 1, %v388
          %v390 = vrot.slane %v381, %v389
          %vm393 = vcmask 1040384
          %v394 = vsel %vm393, %v386, 0.0
          %v395 = vsel %vm393, %v390, 0.0
          %v396 = vadd.f32 %v394, %v395
          %397 = vadd.xlane.f32.xlu0 %v396
          %v398 = vpop.xlane.xlu0 %397
          %v399 = vrot.slane %v398, 4
          %v400 = vadd.f32 %v398, %v399
          %v401 = vrot.slane %v400, 2
          %v402 = vadd.f32 %v400, %v401
          %v403 = vrot.slane %v402, 1
          %v404 = vadd.f32 %v402, %v403
          %s405 = vtos %v404
          %v406 = vstv %s405
          %v407 = vadd.f32 %v406, 0.0
          %408 = vst [vmem:[%s216] sm:$0x1] %v407
        $region44: #{tpu_custom_call.1} parent=27 // pred_fallthru
          _
        %s409 = sand.u32 %s98, 1
        %s410 = scalar_lea.sflag [#allocation5], %s409
        %s411 = sand.u32 %s98, 1
        %s412 = scalar_lea.vmem [#allocation8], %s411
        // Predicated region
        $region45: #{tpu_custom_call.1} parent=27 // pred_check
          %p413 = pneg %p108
        $region46: #{tpu_custom_call.1} parent=27 // pred_check_branch
          %415 = sbr.rel (%p413) target = $region48
        $region47: #{tpu_custom_call.1} parent=27 // pred_region
          %s417 = ssub.s32 16, 16
          %418 = vsyncadd %s410, %s417
          %s419 = smul.addr %s26, 16
          %s420 = scalar_lea.hbm %s2, %s419
          %s422 = sshll.u32 %s412, 4
          %s423 = int_to_ptr.vmem [resolvable:$true] %s422
          %425 = dma.vmem_to_hbm [thread:$0]  %s423, 16, %s420, %s410
        $region48: #{tpu_custom_call.1} parent=27 // pred_fallthru
          _
      $region28: #{tpu_custom_call.1} parent=5 // pred_fallthru
        _
      %p426 = scmp.le.s32.totalorder 2, %s17
      // Predicated region
      $region49: #{tpu_custom_call.1} parent=5 // pred_check
        %p427 = pneg %p426
      $region50: #{tpu_custom_call.1} parent=5 // pred_check_branch
        %429 = sbr.rel (%p427) target = $region52
      $region51: #{tpu_custom_call.1} parent=5 // pred_region
        %s430 = ssub.s32 %s17, 2
        // Predicated region
        $region53: #{tpu_custom_call.1} parent=51 // pred_check
          %p431 = pneg %p114
        $region54: #{tpu_custom_call.1} parent=51 // pred_check_branch
          %433 = sbr.rel (%p431) target = $region56
        $region55: #{tpu_custom_call.1} parent=51 // pred_region
          %s434 = sand.u32 %s99, 1
          %s435 = scalar_lea.sflag [#allocation5], %s434
          %s436 = sand.u32 %s99, 1
          %s437 = scalar_lea.vmem [#allocation8], %s436
          %438 = dma.done %s435, 16
        $region56: #{tpu_custom_call.1} parent=51 // pred_fallthru
          _
      $region52: #{tpu_custom_call.1} parent=5 // pred_fallthru
        _
    $region6: #{tpu_custom_call.1} parent=1 // loop_footer
      %s21 = sadd.s32 1, %s17
    $region7: #{tpu_custom_call.1} parent=1 // loop_footer_branch
      %16 = sbr.rel target = $region3
    $region8: #{tpu_custom_call.1} parent=1 // loop_exit
      _
    %439 = vsyncpa [#allocation4], 1
    %s440 = scalar_lea.sflag [#allocation4], 1
    %441 = vsyncpa %s440, 1
    %442 = vsyncpa [#allocation7], 1
    %s443 = scalar_lea.sflag [#allocation7], 1
    %444 = vsyncpa %s443, 1
    %445 = vsyncpa [#allocation5], 1
    %s446 = scalar_lea.sflag [#allocation5], 1
    %447 = vsyncpa %s446, 1

</llo_original>
